<compile_context>
chip_gen: v7x
topology: tpu7x:2x2x1
jax: 0.10.0
libtpu: 0.0.40
codegen_flags: <defaults>
</compile_context>

<pallas_src>
import functools

import jax
import jax.numpy as jnp
from jax.experimental import pallas as pl
from jax.experimental.pallas import tpu as pltpu

_F_PAD = 128  # lane width: every produced feature dim is zero-padded to 128


def _round_up(v, m):
    return (v + m - 1) // m * m


# --------------------------- edge model kernel ------------------------------
# edge_new = relu(edge_mlp(cat([x[L], edge_attr])))    (tiled over E)
def _edge_kernel(ein_ref, We_ref, be_ref, eout_ref):
    acc = jnp.dot(ein_ref[...], We_ref[...], preferred_element_type=jnp.float32)
    eout_ref[...] = jnp.maximum(acc + be_ref[...], 0.0).astype(eout_ref.dtype)


# ----------------------- node + global model kernel -------------------------
def _node_global_kernel(x_ref, hasin_ref, globb_ref, glob_ref, b1hT_ref, invc_ref,
                        Wn_ref, bn_ref, Wn2a_ref, Wn2b_ref, bn2_ref,
                        Wga_ref, Wgb_ref, bg_ref,
                        xout_ref, gout_ref):
    mm = functools.partial(jnp.dot, preferred_element_type=jnp.float32)

    nodes = mm(x_ref[...], Wn_ref[...]) + bn_ref[...]            # node_mlp(x)      [N,F]
    # softmax-weighted scatter_add of destination features == in-degree indicator
    agg = nodes * hasin_ref[...]                                 # [N,F] * [N,1]
    x_new = jnp.maximum(
        mm(agg, Wn2a_ref[...]) + mm(globb_ref[...], Wn2b_ref[...]) + bn2_ref[...], 0.0)
    xout_ref[...] = x_new.astype(xout_ref.dtype)

    # scatter_mean over batch = one matmul * exact 1/cnt (computed in wrapper)
    mean = mm(b1hT_ref[...], x_new) * invc_ref[...]              # [B,F]
    gout_ref[...] = jnp.maximum(
        mm(glob_ref[...], Wga_ref[...]) + mm(mean, Wgb_ref[...]) + bg_ref[...], 0.0
    ).astype(gout_ref.dtype)


# --------------------------- padding helpers --------------------------------
def _pad_cols_bf16(w):
    return jnp.pad(w, ((0, 0), (0, _F_PAD - w.shape[1]))).astype(jnp.bfloat16)


def _pad_rows_cols_bf16(w):
    return jnp.pad(w, ((0, _F_PAD - w.shape[0]),
                       (0, _F_PAD - w.shape[1]))).astype(jnp.bfloat16)


def _pad_bias(b):
    return jnp.pad(b, (0, _F_PAD - b.shape[0]))[None, :].astype(jnp.float32)


# ------------------------------ wrapper --------------------------------------
def gatv2_block(x, edge_index, edge_attr, glob, batch, params, *, edge_tile=512):
    """Returns (x_new, edge_attr_new, glob_new), matching MetaLayer's outputs."""
    N, node_in = x.shape
    E = edge_index.shape[1]
    B, global_in = glob.shape
    edge_out = params["We"].shape[1]
    node_out = params["Wn"].shape[1]
    global_out = params["Wg"].shape[1]
    f32, bf16 = jnp.float32, jnp.bfloat16

    L, R = edge_index[0], edge_index[1]

    # ---- edge model, tiled over E (parallel grid axis) ----------------------
    te = min(edge_tile, _round_up(E, 8))
    E_pad = _round_up(E, te)
    e_in = jnp.concatenate([x[L], edge_attr], axis=1).astype(bf16)   # [E, node_in+edge_in]
    e_in = jnp.pad(e_in, ((0, E_pad - E), (0, 0)))
    c_in = e_in.shape[1]

    e_p = pl.pallas_call(
        _edge_kernel,
        out_shape=jax.ShapeDtypeStruct((E_pad, _F_PAD), bf16),
        grid=(E_pad // te,),
        in_specs=[pl.BlockSpec((te, c_in), lambda i: (i, 0)),
                  pl.BlockSpec((c_in, _F_PAD), lambda i: (0, 0)),
                  pl.BlockSpec((1, _F_PAD), lambda i: (0, 0))],
        out_specs=pl.BlockSpec((te, _F_PAD), lambda i: (i, 0)),
        compiler_params=pltpu.CompilerParams(dimension_semantics=("parallel",)),
    )(e_in, _pad_cols_bf16(params["We"]), _pad_bias(params["be"]))

    # ---- node + global model (whole graph; softmax cancels to indicator) ----
    glob_b = glob[batch].astype(bf16)                                        # [N, global_in]
    has_in = (jax.ops.segment_sum(jnp.ones((E,), f32), R, num_segments=N) > 0
              ).astype(f32)[:, None]                                         # [N, 1]
    b1h = batch[None, :] == jnp.arange(B)[:, None]                           # [B, N] bool
    b1hT = b1h.astype(bf16)
    inv_cnt = (1.0 / jnp.sum(b1h, axis=1).astype(f32))[:, None]              # [B, 1] exact

    Wn2, Wg = params["Wn2"], params["Wg"]
    vmem = pl.BlockSpec(memory_space=pltpu.MemorySpace.VMEM)
    x_p, g_p = pl.pallas_call(
        _node_global_kernel,
        out_shape=(jax.ShapeDtypeStruct((N, _F_PAD), bf16),
                   jax.ShapeDtypeStruct((B, _F_PAD), f32)),
        in_specs=[vmem] * 14,
        out_specs=(vmem, vmem),
    )(x.astype(bf16), has_in, glob_b, glob.astype(bf16), b1hT, inv_cnt,
      _pad_cols_bf16(params["Wn"]), _pad_bias(params["bn"]),
      _pad_rows_cols_bf16(Wn2[:node_out]), _pad_cols_bf16(Wn2[node_out:]),
      _pad_bias(params["bn2"]),
      _pad_cols_bf16(Wg[:global_in]), _pad_rows_cols_bf16(Wg[global_in:]),
      _pad_bias(params["bg"]))
    # NOTE: params["Wle"], params["ble"], params["a"] are mathematically dead for
    # this forward pass (see header comment) and are intentionally unused.

    return (x_p[:, :node_out].astype(f32),
            e_p[:E, :edge_out].astype(f32),
            g_p[:, :global_out].astype(f32))


# --------------------------- pure-JAX reference -----------------------------
def reference(x, edge_index, edge_attr, glob, batch, params, N, B):
    L, R = edge_index[0], edge_index[1]
    # edge model
    edge_new = jax.nn.relu(
        jnp.concatenate([x[L], edge_attr], axis=1) @ params["We"] + params["be"])
    # node model (full attention path, to validate the algebraic simplification)
    leaky = jax.nn.leaky_relu(
        jnp.concatenate([x[L], x[R], edge_new], axis=1) @ params["Wle"] + params["ble"], 0.2)
    alpha = jnp.sum(leaky * params["a"], axis=-1)
    m = jax.ops.segment_max(alpha, R, num_segments=N)
    ea = jnp.exp(alpha - m[R])
    s = jax.ops.segment_sum(ea, R, num_segments=N)
    alpha = ea / s[R]
    nodes = x @ params["Wn"] + params["bn"]
    agg = jax.ops.segment_sum(nodes[R] * alpha[:, None], R, num_segments=N)
    x_new = jax.nn.relu(
        jnp.concatenate([agg, glob[batch]], axis=1) @ params["Wn2"] + params["bn2"])
    # global model
    cnt = jax.ops.segment_sum(jnp.ones((x.shape[0],), jnp.float32), batch, num_segments=B)
    mean = jax.ops.segment_sum(x_new, batch, num_segments=B) / cnt[:, None]
    g_new = jax.nn.relu(
        jnp.concatenate([glob, mean], axis=1) @ params["Wg"] + params["bg"])
    return x_new, edge_new, g_new


if __name__ == "__main__":
    # module hyper-params (hid is unused by the PyTorch forward as well)
    node_in, edge_in, global_in, hid = 8, 8, 8, 16
    node_out, edge_out, global_out = 8, 8, 8
    N, E, B = 16, 32, 2

    key = jax.random.PRNGKey(0)
    keys = jax.random.split(key, 16)

    def lin(kw, kb, din, dout):
        return (0.1 * jax.random.normal(kw, (din, dout), jnp.float32),
                0.1 * jax.random.normal(kb, (dout,), jnp.float32))

    We, be = lin(keys[0], keys[1], node_in + edge_in, edge_out)        # edge_mlp
    Wle, ble = lin(keys[2], keys[3], 2 * node_in + edge_out, node_out)  # lin_edge
    Wn, bn = lin(keys[4], keys[5], node_in, node_out)                  # node_mlp
    Wn2, bn2 = lin(keys[6], keys[7], node_out + global_in, node_out)   # node_mlp_2
    Wg, bg = lin(keys[8], keys[9], global_in + node_out, global_out)   # global_mlp
    a = 0.1 * jax.random.normal(keys[10], (1, node_out), jnp.float32)  # attention vector

    params = dict(We=We, be=be, Wle=Wle, ble=ble, a=a, Wn=Wn, bn=bn,
                  Wn2=Wn2, bn2=bn2, Wg=Wg, bg=bg)

    # deterministic inputs: 2 graphs of 8 nodes, 16 edges each (within-graph)
    x = jax.random.normal(keys[11], (N, node_in), jnp.float32)
    edge_attr = jax.random.normal(keys[12], (E, edge_in), jnp.float32)
    glob = jax.random.normal(keys[13], (B, global_in), jnp.float32)
    batch = jnp.concatenate([jnp.zeros(8, jnp.int32), jnp.ones(8, jnp.int32)])
    L0 = jax.random.randint(keys[14], (16,), 0, 8)
    R0 = jax.random.randint(keys[15], (16,), 0, 8)
    edge_index = jnp.stack([jnp.concatenate([L0, L0 + 8]),
                            jnp.concatenate([R0, R0 + 8])]).astype(jnp.int32)

    out = jax.block_until_ready(gatv2_block(x, edge_index, edge_attr, glob, batch, params))
    ref = reference(x, edge_index, edge_attr, glob, batch, params, N, B)
    for o, r in zip(out, ref):
        assert o.shape == r.shape and o.dtype == r.dtype
        # bf16-precision matmuls / bf16 output slabs -> 1e-2 tolerance
        assert jnp.allclose(o, r, atol=1e-2, rtol=1e-2), (o, r)

    print("KERNEL_OK")
</pallas_src>

<mosaic_0001>
module attributes {stable_mosaic.version = 11 : i64} {
  func.func @_edge_kernel(%arg0: i32, %arg1: memref<32x16xbf16, #tpu.memory_space<vmem>>, %arg2: memref<16x128xbf16, #tpu.memory_space<vmem>>, %arg3: memref<1x128xf32, #tpu.memory_space<vmem>>, %arg4: memref<32x128xbf16, #tpu.memory_space<vmem>>) attributes {dimension_semantics = [#tpu.dimension_semantics<parallel>], iteration_bounds = array<i64: 1>, scalar_prefetch = 0 : i64, scratch_operands = 0 : i64, tpu.core_type = #tpu.core_type<tc>, window_params = [{transform_indices = @transform_0, window_bounds = array<i64: 32, 16>}, {pipeline_mode = #tpu.pipeline_mode<synchronous>, transform_indices = @transform_1, window_bounds = array<i64: 16, 128>}, {pipeline_mode = #tpu.pipeline_mode<synchronous>, transform_indices = @transform_2, window_bounds = array<i64: 1, 128>}, {transform_indices = @transform_3, window_bounds = array<i64: 32, 128>}]} {
    %c0 = arith.constant 0 : index
    %c0_0 = arith.constant 0 : index
    %0 = vector.load %arg1[%c0, %c0_0] : memref<32x16xbf16, #tpu.memory_space<vmem>>, vector<32x16xbf16>
    %c0_1 = arith.constant 0 : index
    %c0_2 = arith.constant 0 : index
    %1 = vector.load %arg2[%c0_1, %c0_2] : memref<16x128xbf16, #tpu.memory_space<vmem>>, vector<16x128xbf16>
    %cst = arith.constant dense<0.000000e+00> : vector<32x128xf32>
    %2 = tpu.matmul %0, %1, %cst {dimension_numbers = #tpu.dot_dimension_numbers<[1], [0], [0], [1], [0, 0, 1, 1], [], []>} : vector<32x16xbf16>, vector<16x128xbf16>, vector<32x128xf32> -> vector<32x128xf32>
    %c0_3 = arith.constant 0 : index
    %c0_4 = arith.constant 0 : index
    %3 = vector.load %arg3[%c0_3, %c0_4] : memref<1x128xf32, #tpu.memory_space<vmem>>, vector<1x128xf32>
    %4 = vector.broadcast %3 : vector<1x128xf32> to vector<32x128xf32>
    %5 = arith.addf %2, %4 : vector<32x128xf32>
    %cst_5 = arith.constant 0.000000e+00 : f32
    %6 = vector.broadcast %cst_5 : f32 to vector<32x128xf32>
    %7 = arith.maximumf %5, %6 : vector<32x128xf32>
    %8 = arith.truncf %7 : vector<32x128xf32> to vector<32x128xbf16>
    %c0_6 = arith.constant 0 : index
    %c0_7 = arith.constant 0 : index
    %9 = vector.load %arg4[%c0_6, %c0_7] : memref<32x128xbf16, #tpu.memory_space<vmem>>, vector<32x128xbf16>
    tpu.vector_store %arg4[%c0_6, %c0_7], %8 {strides = array<i32>} : memref<32x128xbf16, #tpu.memory_space<vmem>>, vector<32x128xbf16>,
    return
  }
  func.func @transform_0(%arg0: i32) -> (i32, i32) {
    %c0_i32 = arith.constant 0 : i32
    %c0_i32_0 = arith.constant 0 : i32
    return %arg0, %c0_i32 : i32, i32
  }
  func.func @transform_1(%arg0: i32) -> (i32, i32) {
    %c0_i32 = arith.constant 0 : i32
    %c0_i32_0 = arith.constant 0 : i32
    %c0_i32_1 = arith.constant 0 : i32
    return %c0_i32, %c0_i32_0 : i32, i32
  }
  func.func @transform_2(%arg0: i32) -> (i32, i32) {
    %c0_i32 = arith.constant 0 : i32
    %c0_i32_0 = arith.constant 0 : i32
    %c0_i32_1 = arith.constant 0 : i32
    return %c0_i32, %c0_i32_0 : i32, i32
  }
  func.func @transform_3(%arg0: i32) -> (i32, i32) {
    %c0_i32 = arith.constant 0 : i32
    %c0_i32_0 = arith.constant 0 : i32
    return %arg0, %c0_i32 : i32, i32
  }
}

</mosaic_0001>

<llo_original>
// kernel: tpu_custom_call.1
$region0: #{tpu_custom_call.1}
  #allocation0 [shape = 'u32[]', space=smem, size = 0x4, offset = 0x4, fixed_abs, tag = 'smem constant byte address 0x4 - core index']
  #allocation1 [shape = 'u32[144,128]{1,0:T(1,128)}', space=vmem, size = 0x12000, scoped, tag = 'internal scratch']
  %s0 = inlined_call_operand.vmem [shape: bf16[32,16], index: 0, kind: input, shape index: {}]
  %s1 = inlined_call_operand.vmem [shape: bf16[16,128], index: 1, kind: input, shape index: {}]
  %s2 = inlined_call_operand.vmem [shape: f32[1,128], index: 2, kind: input, shape index: {}]
  %s3 = inlined_call_operand.hbm [shape: bf16[32,128], index: 3, kind: output, shape index: {}]
  %s4 = sld [smem:[#allocation0]]
  $region22: #{tpu_custom_call.1} parent=0
    _
  %s6 = ssub.s32 1, %s4
  %s7 = scalar_select 0, %s6, %s4
  $region1: #{tpu_custom_call.1} parent=0
    #allocation2 [shape = 'u8[8192]{0}', space=vmem, size = 0x2000, scoped, tag = 'output window, operand 0, single buffered']
    #allocation3 [shape = 's32[1]{0}', space=sflag, size = 0x4, scoped, tag = 'scoped memory for tpu_custom_call.1']
    %8 = vsyncpa [#allocation3], 0
    // Predicated region
    $region2: #{tpu_custom_call.1} parent=1 // pred_check
      _
    $region3: #{tpu_custom_call.1} parent=1 // pred_check_branch
      %10 = sbr.rel (0) target = $region5
    $region4: #{tpu_custom_call.1} parent=1 // pred_region
      _
    $region5: #{tpu_custom_call.1} parent=1 // pred_fallthru
      _
    // Predicated region
    $region6: #{tpu_custom_call.1} parent=1 // pred_check
      _
    $region7: #{tpu_custom_call.1} parent=1 // pred_check_branch
      %12 = sbr.rel (0) target = $region9
    $region8: #{tpu_custom_call.1} parent=1 // pred_region
      _
    $region9: #{tpu_custom_call.1} parent=1 // pred_fallthru
      _
    // Predicated region
    $region10: #{tpu_custom_call.1} parent=1 // pred_check
      _
    $region11: #{tpu_custom_call.1} parent=1 // pred_check_branch
      %14 = sbr.rel (0) target = $region13
    $region12: #{tpu_custom_call.1} parent=1 // pred_region
      _
    $region13: #{tpu_custom_call.1} parent=1 // pred_fallthru
      _
    %v16 = vld [vmem:[%s0] sm:$0xf]
    %v17 = vld [vmem:[%s0 + $0x4] sm:$0xf]
    %v18 = vld [vmem:[%s0 + $0x8] sm:$0xf]
    %v19 = vld [vmem:[%s0 + $0xc] sm:$0xf]
    %v20 = vld [vmem:[%s1] sm:$0xf]
    %v21 = vld [vmem:[%s1 + $0x4] sm:$0xf]
    %v22 = vld [vmem:[%s2] sm:$0x1]
    %v24 = vlaneseq
    %v25 = vshrl.u32 %v24, 7
    %v26 = vsub.s32 0, %v25
    %v27 = vrot.slane %v22, %v26
    %v33 = vunpack.c.l.b16 %v16
    %v34 = vunpack.c.l.b16 %v17
    %v35 = vunpack.c.l.b16 %v18
    %v36 = vunpack.c.l.b16 %v19
    %v37 = vpack.c.b16 %v34, %v33
    %v38 = vpack.c.b16 %v36, %v35
    %v41 = vunpack.c.l.b16 %v20
    %v42 = vunpack.c.l.b16 %v21
    %v43 = vpack.c.b16 %v42, %v41
    %vm45 = vcmask 130048
    %v47 = vsel %vm45, %v37, 0
    %v50 = vsel %vm45, %v38, 0
    %52 = vmatprep.subr.bf16.mxu0 0
    %53 = vmatpush1.bf16.msra.mxu0 %v43
    %54 = vmatprep.subr.bf16.mxu0 0
    %55 = vmatpush1.bf16.msra.mxu0 0
    %56 = vmatprep.subr.bf16.mxu0 0
    %57 = vmatpush1.bf16.msra.mxu0 0
    %58 = vmatprep.subr.bf16.mxu0 0
    %59 = vmatpush1.bf16.msra.mxu0 0
    %60 = vmatprep.subr.bf16.mxu0 0
    %61 = vmatpush1.bf16.msra.mxu0 0
    %62 = vmatprep.subr.bf16.mxu0 0
    %63 = vmatpush1.bf16.msra.mxu0 0
    %64 = vmatprep.subr.bf16.mxu0 0
    %65 = vmatpush1.bf16.msra.mxu0 0
    %66 = vmatprep.subr.bf16.mxu0 0
    %67 = vmatpush1.bf16.msra.mxu0 0
    %68 = vmatprep.subr.bf16.mxu0 0
    %69 = vmatpush1.bf16.msra.mxu0 0
    %70 = vmatprep.subr.bf16.mxu0 0
    %71 = vmatpush1.bf16.msra.mxu0 0
    %72 = vmatprep.subr.bf16.mxu0 0
    %73 = vmatpush1.bf16.msra.mxu0 0
    %74 = vmatprep.subr.bf16.mxu0 0
    %75 = vmatpush1.bf16.msra.mxu0 0
    %76 = vmatprep.subr.bf16.mxu0 0
    %77 = vmatpush1.bf16.msra.mxu0 0
    %78 = vmatprep.subr.bf16.mxu0 0
    %79 = vmatpush1.bf16.msra.mxu0 0
    %80 = vmatprep.subr.bf16.mxu0 0
    %81 = vmatpush1.bf16.msra.mxu0 0
    %82 = vmatprep.subr.bf16.mxu0 0
    %83 = vmatpush1.bf16.msra.mxu0 0
    %84 = vmatprep.mubr.bf16.mxu0 0
    %85 = vmatmul.mubr.bf16.gmra.mrb[0].mxu0 %v47
    %v86 = vpop.f32.mrb[0].mxu0
    %v87 = vadd.f32 %v27, %v86
    %v88 = vpop.f32.mrb[0].mxu0
    %v89 = vpop.f32.mrb[0].mxu0
    %v90 = vadd.f32 %v27, %v89
    %v91 = vpop.f32.mrb[0].mxu0
    %92 = vmatprep.mubr.bf16.mxu0 0
    %93 = vmatmul.mubr.bf16.gmra.mrb[0].mxu0 %v50
    %v94 = vpop.f32.mrb[0].mxu0
    %v95 = vadd.f32 %v27, %v94
    %v96 = vpop.f32.mrb[0].mxu0
    %v97 = vpop.f32.mrb[0].mxu0
    %v98 = vadd.f32 %v27, %v97
    %v99 = vpop.f32.mrb[0].mxu0
    %100 = vdwg.mxu0
    %v101 = vmax.f32 %v87, 0.0
    %v102 = vmax.f32 %v90, 0.0
    %v103 = vmax.f32 %v95, 0.0
    %v104 = vmax.f32 %v98, 0.0
    %v105 = vpack.c.bf16 %v102, %v101
    %v106 = vpack.c.bf16 %v104, %v103
    %v109 = vunpack.c.l.b16 %v105
    %v110 = vunpack.c.h.b16 %v105
    %v111 = vunpack.c.l.b16 %v106
    %v112 = vunpack.c.h.b16 %v106
    %v113 = vpack.c.b16 %v109, %v109
    %v114 = vpack.c.b16 %v110, %v110
    %v115 = vpack.c.b16 %v111, %v111
    %v116 = vpack.c.b16 %v112, %v112
    %121 = vst [vmem:[#allocation2] sm:$0xf] %v113
    %122 = vst [vmem:[#allocation2 + $0x4] sm:$0xf] %v114
    %123 = vst [vmem:[#allocation2 + $0x8] sm:$0xf] %v115
    %124 = vst [vmem:[#allocation2 + $0xc] sm:$0xf] %v116
    // Predicated region
    $region14: #{tpu_custom_call.1} parent=1 // pred_check
      _
    $region15: #{tpu_custom_call.1} parent=1 // pred_check_branch
      %126 = sbr.rel (0) target = $region17
    $region16: #{tpu_custom_call.1} parent=1 // pred_region
      %s128 = ssub.s32 256, 256
      %129 = vsyncadd [#allocation3], %s128
      %s130 = sshll.u32 [#allocation2], 4
      %s131 = int_to_ptr.vmem [resolvable:$true] %s130
      %136 = dma.vmem_to_hbm [thread:$0]  %s131, 256, %s3, [#allocation3], 64, 64, 4
    $region17: #{tpu_custom_call.1} parent=1 // pred_fallthru
      _
    // Predicated region
    $region18: #{tpu_custom_call.1} parent=1 // pred_check
      _
    $region19: #{tpu_custom_call.1} parent=1 // pred_check_branch
      %138 = sbr.rel (0) target = $region21
    $region20: #{tpu_custom_call.1} parent=1 // pred_region
      %139 = dma.done [#allocation3], 256
    $region21: #{tpu_custom_call.1} parent=1 // pred_fallthru
      _
    %140 = vsyncpa [#allocation3], 1

</llo_original>
